<compile_context>
chip_gen: v7x
topology: tpu7x:2x2x1
jax: 0.10.0
libtpu: 0.0.40
codegen_flags: <defaults>
</compile_context>

<pallas_src>
import jax
import jax.numpy as jnp
from jax.experimental import pallas as pl
from jax.experimental.pallas import tpu as pltpu

_LANE = 128            # vreg lane width
_SUBLANE = 8           # vreg sublane count (f32)
_MAX_TILE_ROWS = 4096  # 4096 x 128 f32 = 2 MiB/operand; 3 operands x 2 bufs
                       # = 12 MiB -> fits v5e's 16 MiB default scoped VMEM.
_MIN_GRID_BLOCKS = 4   # aim for >=4 grid steps (v7x: 2 TCs x >=2 steps each).


def toy_memplan_kernel(a_ref, b_ref, o_ref):
    a = a_ref[...]
    b = b_ref[...]
    o = a
    # 10 fixed iterations of the elementwise recurrence, unrolled and fused.
    for _ in range(10):
        o = o * a
        o = o + b
    o_ref[...] = o


def _choose_tile_rows(rows: int) -> int:
    """Full array if tiny, else a multiple of 8, capped at _MAX_TILE_ROWS,
    chosen so the grid has at least _MIN_GRID_BLOCKS steps."""
    if rows <= _SUBLANE * _MIN_GRID_BLOCKS:
        # Single exact block; block shape == full array dims is always legal.
        return rows
    t = (rows // _MIN_GRID_BLOCKS) // _SUBLANE * _SUBLANE
    return max(_SUBLANE, min(_MAX_TILE_ROWS, t))


@jax.jit
def toy_memplan(a: jax.Array, b: jax.Array) -> jax.Array:
    assert a.shape == b.shape and a.dtype == b.dtype and a.ndim == 1
    n = a.shape[0]

    rows = pl.cdiv(n, _LANE)
    padded = rows * _LANE

    if padded == n:
        # Aligned fast path: zero wrapper copies (reshape is free under jit).
        a2 = a.reshape(rows, _LANE)
        b2 = b.reshape(rows, _LANE)
    else:
        # Ragged n: pad only to the next lane multiple (<=127 elements).
        pad = padded - n
        a2 = jnp.pad(a, (0, pad)).reshape(rows, _LANE)
        b2 = jnp.pad(b, (0, pad)).reshape(rows, _LANE)

    tile_rows = _choose_tile_rows(rows)
    grid = (pl.cdiv(rows, tile_rows),)  # partial last block is masked by Pallas
    block = (tile_rows, _LANE)

    cost = pl.CostEstimate(
        flops=20 * padded,           # 10 * (mul + add) per element
        transcendentals=0,
        bytes_accessed=12 * padded,  # read a, read b, write o (f32)
    )

    out2 = pl.pallas_call(
        toy_memplan_kernel,
        out_shape=jax.ShapeDtypeStruct((rows, _LANE), a.dtype),
        grid=grid,
        in_specs=[
            pl.BlockSpec(block, lambda i: (i, 0)),
            pl.BlockSpec(block, lambda i: (i, 0)),
        ],
        out_specs=pl.BlockSpec(block, lambda i: (i, 0)),
        compiler_params=pltpu.CompilerParams(
            # Row-tiles are independent: sharded across both TensorCores on
            # v7x; harmless on single-TC v5e/v6e.
            dimension_semantics=("parallel",),
        ),
        cost_estimate=cost,
    )(a2, b2)

    out = out2.reshape(padded)
    if padded != n:
        out = out[:n]
    return out


def toy_memplan_ref(a: jax.Array, b: jax.Array) -> jax.Array:
    o = a
    for _ in range(10):
        o = o * a
        o = o + b
    return o


if __name__ == "__main__":
    # --- module-sized test: same shape as get_random_inputs() = randn(10) ---
    key = jax.random.PRNGKey(0)
    ka, kb = jax.random.split(key)
    a = jax.random.normal(ka, (10,), dtype=jnp.float32)
    b = jax.random.normal(kb, (10,), dtype=jnp.float32)

    out = jax.block_until_ready(toy_memplan(a, b))
    ref = toy_memplan_ref(a, b)
    assert out.shape == ref.shape and out.dtype == ref.dtype
    # The recurrence amplifies tiny rounding-order differences (e.g. FMA
    # fusion inside the fused kernel vs. separate eager ops), so compare with
    # a tolerance that reflects its conditioning, not bit-exactness.
    assert jnp.allclose(out, ref, rtol=1e-3, atol=1e-3), "mismatch (n=10)"

    # --- exercise the tiled multi-block paths (aligned + ragged/partial) ----
    # Use |a| < 1 so rounding differences cannot amplify through the loop.
    for n in (131072, 100003):  # aligned multi-block / ragged + partial block
        k1, k2 = jax.random.split(jax.random.PRNGKey(n))
        a_t = jax.random.uniform(k1, (n,), jnp.float32, minval=-0.8, maxval=0.8)
        b_t = jax.random.uniform(k2, (n,), jnp.float32, minval=-1.0, maxval=1.0)
        o_t = jax.block_until_ready(toy_memplan(a_t, b_t))
        r_t = toy_memplan_ref(a_t, b_t)
        assert o_t.shape == r_t.shape
        assert jnp.allclose(o_t, r_t, rtol=1e-4, atol=1e-4), f"mismatch (n={n})"

    print("KERNEL_OK")
</pallas_src>

<mosaic_0001>
module attributes {stable_mosaic.version = 11 : i64} {
  func.func @toy_memplan_kernel(%arg0: i32, %arg1: memref<1x128xf32, #tpu.memory_space<vmem>>, %arg2: memref<1x128xf32, #tpu.memory_space<vmem>>, %arg3: memref<1x128xf32, #tpu.memory_space<vmem>>) attributes {dimension_semantics = [#tpu.dimension_semantics<parallel>], iteration_bounds = array<i64: 1>, scalar_prefetch = 0 : i64, scratch_operands = 0 : i64, tpu.core_type = #tpu.core_type<tc>, window_params = [{transform_indices = @transform_0, window_bounds = array<i64: 1, 128>}, {transform_indices = @transform_1, window_bounds = array<i64: 1, 128>}, {transform_indices = @transform_2, window_bounds = array<i64: 1, 128>}]} {
    %c0 = arith.constant 0 : index
    %c0_0 = arith.constant 0 : index
    %0 = vector.load %arg1[%c0, %c0_0] : memref<1x128xf32, #tpu.memory_space<vmem>>, vector<1x128xf32>
    %c0_1 = arith.constant 0 : index
    %c0_2 = arith.constant 0 : index
    %1 = vector.load %arg2[%c0_1, %c0_2] : memref<1x128xf32, #tpu.memory_space<vmem>>, vector<1x128xf32>
    %2 = arith.mulf %0, %0 : vector<1x128xf32>
    %3 = arith.addf %2, %1 : vector<1x128xf32>
    %4 = arith.mulf %3, %0 : vector<1x128xf32>
    %5 = arith.addf %4, %1 : vector<1x128xf32>
    %6 = arith.mulf %5, %0 : vector<1x128xf32>
    %7 = arith.addf %6, %1 : vector<1x128xf32>
    %8 = arith.mulf %7, %0 : vector<1x128xf32>
    %9 = arith.addf %8, %1 : vector<1x128xf32>
    %10 = arith.mulf %9, %0 : vector<1x128xf32>
    %11 = arith.addf %10, %1 : vector<1x128xf32>
    %12 = arith.mulf %11, %0 : vector<1x128xf32>
    %13 = arith.addf %12, %1 : vector<1x128xf32>
    %14 = arith.mulf %13, %0 : vector<1x128xf32>
    %15 = arith.addf %14, %1 : vector<1x128xf32>
    %16 = arith.mulf %15, %0 : vector<1x128xf32>
    %17 = arith.addf %16, %1 : vector<1x128xf32>
    %18 = arith.mulf %17, %0 : vector<1x128xf32>
    %19 = arith.addf %18, %1 : vector<1x128xf32>
    %20 = arith.mulf %19, %0 : vector<1x128xf32>
    %21 = arith.addf %20, %1 : vector<1x128xf32>
    %c0_3 = arith.constant 0 : index
    %c0_4 = arith.constant 0 : index
    %22 = vector.load %arg3[%c0_3, %c0_4] : memref<1x128xf32, #tpu.memory_space<vmem>>, vector<1x128xf32>
    tpu.vector_store %arg3[%c0_3, %c0_4], %21 {strides = array<i32>} : memref<1x128xf32, #tpu.memory_space<vmem>>, vector<1x128xf32>,
    return
  }
  func.func @transform_0(%arg0: i32) -> (i32, i32) {
    %c0_i32 = arith.constant 0 : i32
    %c0_i32_0 = arith.constant 0 : i32
    return %arg0, %c0_i32 : i32, i32
  }
  func.func @transform_1(%arg0: i32) -> (i32, i32) {
    %c0_i32 = arith.constant 0 : i32
    %c0_i32_0 = arith.constant 0 : i32
    return %arg0, %c0_i32 : i32, i32
  }
  func.func @transform_2(%arg0: i32) -> (i32, i32) {
    %c0_i32 = arith.constant 0 : i32
    %c0_i32_0 = arith.constant 0 : i32
    return %arg0, %c0_i32 : i32, i32
  }
}

</mosaic_0001>

<llo_original>
// kernel: toy_memplan.1
$region0: #{toy_memplan.1}
  #allocation0 [shape = 'u32[]', space=smem, size = 0x4, offset = 0x4, fixed_abs, tag = 'smem constant byte address 0x4 - core index']
  #allocation1 [shape = 'u32[144,128]{1,0:T(1,128)}', space=vmem, size = 0x12000, scoped, tag = 'internal scratch']
  %s0 = inlined_call_operand.vmem [shape: f32[1,128], index: 0, kind: input, shape index: {}]
  %s1 = inlined_call_operand.vmem [shape: f32[1,128], index: 1, kind: input, shape index: {}]
  %s2 = inlined_call_operand.vmem [shape: f32[1,128], index: 2, kind: output, shape index: {}]
  %s3 = sld [smem:[#allocation0]]
  $region18: #{toy_memplan.1} parent=0
    _
  %s5 = ssub.s32 1, %s3
  %s6 = scalar_select 0, %s5, %s3
  // Predicated region
  $region2: #{toy_memplan.1} parent=0 // pred_check
    _
  $region3: #{toy_memplan.1} parent=0 // pred_check_branch
    %8 = sbr.rel (0) target = $region5
  $region4: #{toy_memplan.1} parent=0 // pred_region
    _
  $region5: #{toy_memplan.1} parent=0 // pred_fallthru
    _
  // Predicated region
  $region6: #{toy_memplan.1} parent=0 // pred_check
    _
  $region7: #{toy_memplan.1} parent=0 // pred_check_branch
    %10 = sbr.rel (0) target = $region9
  $region8: #{toy_memplan.1} parent=0 // pred_region
    _
  $region9: #{toy_memplan.1} parent=0 // pred_fallthru
    _
  %v11 = vld [vmem:[%s0] sm:$0x1]
  %v12 = vld [vmem:[%s1] sm:$0x1]
  %v13 = vmul.f32 %v11, %v11
  %v14 = vadd.f32 %v13, %v12
  %v15 = vmul.f32 %v14, %v11
  %v16 = vadd.f32 %v15, %v12
  %v17 = vmul.f32 %v16, %v11
  %v18 = vadd.f32 %v17, %v12
  %v19 = vmul.f32 %v18, %v11
  %v20 = vadd.f32 %v19, %v12
  %v21 = vmul.f32 %v20, %v11
  %v22 = vadd.f32 %v21, %v12
  %v23 = vmul.f32 %v22, %v11
  %v24 = vadd.f32 %v23, %v12
  %v25 = vmul.f32 %v24, %v11
  %v26 = vadd.f32 %v25, %v12
  %v27 = vmul.f32 %v26, %v11
  %v28 = vadd.f32 %v27, %v12
  %v29 = vmul.f32 %v28, %v11
  %v30 = vadd.f32 %v29, %v12
  %v31 = vmul.f32 %v30, %v11
  %v32 = vadd.f32 %v31, %v12
  %33 = vst [vmem:[%s2] sm:$0x1] %v32
  // Predicated region
  $region10: #{toy_memplan.1} parent=0 // pred_check
    _
  $region11: #{toy_memplan.1} parent=0 // pred_check_branch
    %35 = sbr.rel (0) target = $region13
  $region12: #{toy_memplan.1} parent=0 // pred_region
    _
  $region13: #{toy_memplan.1} parent=0 // pred_fallthru
    _
  // Predicated region
  $region14: #{toy_memplan.1} parent=0 // pred_check
    _
  $region15: #{toy_memplan.1} parent=0 // pred_check_branch
    %37 = sbr.rel (0) target = $region17
  $region16: #{toy_memplan.1} parent=0 // pred_region
    _
  $region17: #{toy_memplan.1} parent=0 // pred_fallthru
    _

</llo_original>
